<compile_context>
chip_gen: v7x
topology: tpu7x:2x2x1
jax: 0.10.0
libtpu: 0.0.40
codegen_flags: <defaults>
</compile_context>

<pallas_src>
import jax
import jax.numpy as jnp
from jax.experimental import pallas as pl
from jax.experimental.pallas import tpu as pltpu


_MiB = 1024 * 1024
_TARGET_BLOCK_BYTES = 8 * _MiB      # per operand, per grid step
_MIN_GRID_STEPS = 8                 # >= ~4 steps per TensorCore on v7x (2 TCs)
_SMALL_BYPASS_BYTES = 1 * _MiB      # below this, plain XLA fusion wins on launch cost
_LANE_CANDIDATES = (4096, 2048, 1024, 512, 256, 128)


def _sublane_pack(dtype):
    # rows per packed sublane tile: 8 for 4-byte, 16 for 2-byte, 32 for 1-byte dtypes
    return {4: 8, 2: 16, 1: 32}.get(jnp.dtype(dtype).itemsize, 8)


def _vmem_limit_bytes():
    # Per-generation scoped-VMEM limit: ~3/4 of physical VMEM, capped at 64 MiB.
    #   v5e/v6e (128 MiB physical) -> 64 MiB; v7x (64 MiB per TC) -> 48 MiB.
    try:
        cap = int(pltpu.get_tpu_info().vmem_capacity_bytes)
        return int(min(64 * _MiB, max(32 * _MiB, (cap * 3) // 4)))
    except Exception:
        return 48 * _MiB  # safe on all three generations


def _silent_action_kernel(thr_ref, x_ref, o_ref):
    # thr_ref: SMEM scalar (1,); x_ref / o_ref: VMEM tiles (block_rows, lanes).
    t = thr_ref[0]
    o_ref[...] = jnp.maximum(x_ref[...] - t, jnp.array(0, dtype=o_ref.dtype))


def _run_2d(x2d, thr, block_rows, lanes):
    rows = x2d.shape[0]
    itemsize = x2d.dtype.itemsize
    return pl.pallas_call(
        _silent_action_kernel,
        out_shape=jax.ShapeDtypeStruct(x2d.shape, x2d.dtype),
        grid_spec=pltpu.PrefetchScalarGridSpec(
            num_scalar_prefetch=0,
            # cdiv grid: a non-dividing last block is handled by masked OOB stores
            # (OOB input lanes read garbage, but those results are never written).
            grid=(pl.cdiv(rows, block_rows),),
            in_specs=[
                pl.BlockSpec(memory_space=pltpu.SMEM),                # threshold scalar
                pl.BlockSpec((block_rows, lanes), lambda i: (i, 0)),  # x tile
            ],
            out_specs=pl.BlockSpec((block_rows, lanes), lambda i: (i, 0)),
        ),
        compiler_params=pltpu.CompilerParams(
            dimension_semantics=("parallel",),
            vmem_limit_bytes=_vmem_limit_bytes(),
        ),
        cost_estimate=pl.CostEstimate(
            flops=2 * x2d.size,
            transcendentals=0,
            bytes_accessed=2 * x2d.size * itemsize,
        ),
    )(thr, x2d)


def silent_action(x, threshold):
    """relu(x - threshold); Pallas TPU kernel on the large lane-dense path."""
    orig_shape = x.shape
    dtype = x.dtype
    total = x.size
    itemsize = jnp.dtype(dtype).itemsize
    thr = jnp.asarray(threshold, dtype=dtype)

    # Tiny inputs (launch-cost dominated) and ragged totals (not 128-divisible):
    # a fused XLA elementwise op is already 1 read + 1 write at the HBM roofline
    # and avoids any pad / slice-back copies.
    if total == 0 or total * itemsize < _SMALL_BYPASS_BYTES or total % 128 != 0:
        return jnp.maximum(x - thr, jnp.array(0, dtype=dtype))

    sub = _sublane_pack(dtype)
    # Widest lane count dividing the element count -> wide unmasked vector stores.
    lanes = next(w for w in _LANE_CANDIDATES if total % w == 0)
    rows = total // lanes

    # block_rows: as large as the ~8 MiB/operand budget allows, but keep at least
    # ~_MIN_GRID_STEPS grid steps so both v7x TCs stream and DMA double-buffering
    # has work to overlap. Always a multiple of the packed sublane count.
    max_rows_vmem = max(sub, ((_TARGET_BLOCK_BYTES // itemsize) // lanes) // sub * sub)
    rows_per_step = -(-rows // _MIN_GRID_STEPS)                 # ceil(rows / steps)
    rows_min_steps = max(sub, -(-rows_per_step // sub) * sub)   # round up to sublane mult
    block_rows = min(max_rows_vmem, rows_min_steps)
    if rows <= block_rows:
        block_rows = rows  # full-extent block is always legal

    out2d = _run_2d(x.reshape(rows, lanes), thr.reshape((1,)), block_rows, lanes)
    return out2d.reshape(orig_shape)


if __name__ == "__main__":
    threshold = 0.25
    k0, k1, k2, k3 = jax.random.split(jax.random.PRNGKey(0), 4)

    def ref(x):
        return jnp.maximum(x - jnp.asarray(threshold, x.dtype), 0.0)

    # 1) Small NCHW input consistent with the module (bypass path, launch-cost regime).
    x_small = jax.random.normal(k0, (2, 4, 16, 16), dtype=jnp.float32)
    y_small = jax.block_until_ready(silent_action(x_small, threshold))
    assert y_small.shape == x_small.shape and y_small.dtype == x_small.dtype
    assert jnp.allclose(y_small, ref(x_small), atol=1e-6), "mismatch (bypass path)"

    # 2) Pallas kernel path, evenly dividing blocks (2 MiB -> lanes=4096, 8 grid steps).
    x_kern = jax.random.normal(k1, (4, 8, 128, 128), dtype=jnp.float32)
    y_kern = jax.block_until_ready(silent_action(x_kern, threshold))
    assert y_kern.shape == x_kern.shape and y_kern.dtype == x_kern.dtype
    assert jnp.allclose(y_kern, ref(x_kern), atol=1e-6), "mismatch (kernel path)"

    # 3) Pallas kernel path with a masked partial last block (rows=100, block_rows=16).
    x_part = jax.random.normal(k2, (2, 50, 64, 64), dtype=jnp.float32)
    y_part = jax.block_until_ready(silent_action(x_part, threshold))
    assert jnp.allclose(y_part, ref(x_part), atol=1e-6), "mismatch (partial block)"

    # 4) Ragged element count (not divisible by 128) -> plain jnp path.
    x_rag = jax.random.normal(k3, (3, 5, 7), dtype=jnp.float32)
    y_rag = jax.block_until_ready(silent_action(x_rag, threshold))
    assert jnp.allclose(y_rag, ref(x_rag), atol=1e-6), "mismatch (ragged path)"

    print("KERNEL_OK")
</pallas_src>

<mosaic_0001>
module attributes {stable_mosaic.version = 11 : i64} {
  func.func @_silent_action_kernel(%arg0: i32, %arg1: memref<1xf32, #tpu.memory_space<smem>>, %arg2: memref<16x4096xf32, #tpu.memory_space<vmem>>, %arg3: memref<16x4096xf32, #tpu.memory_space<vmem>>) attributes {dimension_semantics = [#tpu.dimension_semantics<parallel>], iteration_bounds = array<i64: 8>, scalar_prefetch = 0 : i64, scratch_operands = 0 : i64, tpu.core_type = #tpu.core_type<tc>, window_params = [{transform_indices = @transform_0, window_bounds = array<i64: 1>}, {transform_indices = @transform_1, window_bounds = array<i64: 16, 4096>}, {transform_indices = @transform_2, window_bounds = array<i64: 16, 4096>}]} {
    %c0 = arith.constant 0 : index
    %0 = memref.load %arg1[%c0] : memref<1xf32, #tpu.memory_space<smem>>
    %c0_0 = arith.constant 0 : index
    %c0_1 = arith.constant 0 : index
    %1 = vector.load %arg2[%c0_0, %c0_1] : memref<16x4096xf32, #tpu.memory_space<vmem>>, vector<16x4096xf32>
    %2 = vector.broadcast %0 : f32 to vector<16x4096xf32>
    %3 = arith.subf %1, %2 : vector<16x4096xf32>
    %cst = arith.constant 0.000000e+00 : f32
    %4 = vector.broadcast %cst : f32 to vector<16x4096xf32>
    %5 = arith.maximumf %3, %4 : vector<16x4096xf32>
    %c0_2 = arith.constant 0 : index
    %c0_3 = arith.constant 0 : index
    %6 = vector.load %arg3[%c0_2, %c0_3] : memref<16x4096xf32, #tpu.memory_space<vmem>>, vector<16x4096xf32>
    tpu.vector_store %arg3[%c0_2, %c0_3], %5 {strides = array<i32>} : memref<16x4096xf32, #tpu.memory_space<vmem>>, vector<16x4096xf32>,
    return
  }
  func.func @transform_0(%arg0: i32) -> i32 {
    %c0_i32 = arith.constant 0 : i32
    %c0_i32_0 = arith.constant 0 : i32
    return %c0_i32 : i32
  }
  func.func @transform_1(%arg0: i32) -> (i32, i32) {
    %c0_i32 = arith.constant 0 : i32
    %c0_i32_0 = arith.constant 0 : i32
    return %arg0, %c0_i32 : i32, i32
  }
  func.func @transform_2(%arg0: i32) -> (i32, i32) {
    %c0_i32 = arith.constant 0 : i32
    %c0_i32_0 = arith.constant 0 : i32
    return %arg0, %c0_i32 : i32, i32
  }
}

</mosaic_0001>

<llo_original>
// kernel: tpu_custom_call.1
$region0: #{tpu_custom_call.1}
  #allocation0 [shape = 'u32[]', space=smem, size = 0x4, offset = 0x4, fixed_abs, tag = 'smem constant byte address 0x4 - core index']
  #allocation1 [shape = 'u32[144,128]{1,0:T(1,128)}', space=vmem, size = 0x12000, scoped, tag = 'internal scratch']
  #allocation2 [shape = 'f32[1]{0:T(128)S(6)}', space=smem, size = 0x200, scoped, tag = 'scoped memory for tpu_custom_call.1']
  %s0 = inlined_call_operand.<no memory space> [shape: f32[1], index: 0, kind: input, shape index: {}]
  %s1 = inlined_call_operand.hbm [shape: f32[128,4096], index: 1, kind: input, shape index: {}]
  %s2 = inlined_call_operand.hbm [shape: f32[128,4096], index: 2, kind: output, shape index: {}]
  %s3 = sld [smem:[#allocation0]]
  $region45: #{tpu_custom_call.1} parent=0
    _
  %s5 = ssub.s32 1, %s3
  %s6 = scalar_select 0, %s5, %s3
  %7 = sst [smem:[#allocation2]] %s0
  $region1: #{tpu_custom_call.1} parent=0
    #allocation3 [shape = 'u8[524288]{0}', space=vmem, size = 0x80000, scoped, tag = 'input window, operand 1']
    #allocation4 [shape = 's32[2]{0}', space=sflag, size = 0x8, scoped, tag = 'scoped memory for tpu_custom_call.1']
    #allocation5 [shape = 's32[2]{0}', space=sflag, size = 0x8, scoped, tag = 'scoped memory for tpu_custom_call.1']
    #allocation6 [shape = 'u8[524288]{0}', space=vmem, size = 0x80000, scoped, tag = 'output window, operand 0']
    %8 = vsyncpa [#allocation4], 0
    %s9 = scalar_lea.sflag [#allocation4], 1
    %10 = vsyncpa %s9, 0
    %11 = vsyncpa [#allocation5], 0
    %s12 = scalar_lea.sflag [#allocation5], 1
    %13 = vsyncpa %s12, 0
    loop: start=0, step=1, limit=10
    $region2: #{tpu_custom_call.1} parent=1 // loop_pre_header
      _
    $region3: #{tpu_custom_call.1} parent=1 // loop_header
      %s15 = sphi 0, %s19
      %p16 = scmp.ge.s32.totalorder %s15, 10
      %s23 = sphi 0, %s23
      %s25 = sphi 0, %s23
      %s26 = sphi 0, %s25
      %s40 = sphi 0, %s26
      %s46 = sphi 0, %s48
      %s49 = sphi 0, %s46
      %s50 = sphi 0, %s49
      %s66 = sphi 0, %s50
      %s72 = sphi 0, %s74
      %s75 = sphi 0, %s72
      %s76 = sphi 0, %s75
      %s92 = sphi 0, %s76
    $region4: #{tpu_custom_call.1} parent=1 // loop_header_branch
      %18 = sbr.rel (%p16) target = $region8
    $region5: #{tpu_custom_call.1} parent=1 // loop_body
      %s20 = ssub.s32 %s15, 1
      %s21 = ssub.s32 %s15, 2
      %s22 = sadd.s32 %s15, 1
      %s24 = sadd.s32 %s23, 1
      %p27 = scmp.eq.s32.totalorder %s15, 7
      %p28 = scmp.ne.s32.totalorder %s23, %s25
      %p29 = scmp.eq.s32.totalorder %s15, 0
      %p30 = por %p28, %p29
      %p31 = scmp.ne.s32.totalorder %s23, %s25
      %p32 = scmp.eq.s32.totalorder %s20, 7
      %p33 = por %p31, %p32
      %p34 = scmp.ne.s32.totalorder %s25, %s26
      %p35 = scmp.eq.s32.totalorder %s20, 0
      %p36 = por %p34, %p35
      %p37 = scmp.ne.s32.totalorder %s25, %s26
      %p38 = scmp.eq.s32.totalorder %s21, 7
      %p39 = por %p37, %p38
      %p41 = scmp.ne.s32.totalorder %s26, %s40
      %p42 = scmp.eq.s32.totalorder %s21, 0
      %p43 = por %p41, %p42
      %s44 = ssub.s32 %s15, %s22
      %p45 = scmp.eq.s32.totalorder %s44, 0
      %s47 = sadd.s32 %s46, 1
      %s48 = scalar_select %p45, %s46, %s47
      %p51 = pneg %p45
      %p52 = scmp.eq.s32.totalorder %s15, 7
      %p53 = por %p51, %p52
      %p54 = scmp.ne.s32.totalorder %s46, %s49
      %p55 = scmp.eq.s32.totalorder %s15, 0
      %p56 = por %p54, %p55
      %p57 = scmp.ne.s32.totalorder %s46, %s49
      %p58 = scmp.eq.s32.totalorder %s20, 7
      %p59 = por %p57, %p58
      %p60 = scmp.ne.s32.totalorder %s49, %s50
      %p61 = scmp.eq.s32.totalorder %s20, 0
      %p62 = por %p60, %p61
      %p63 = scmp.ne.s32.totalorder %s49, %s50
      %p64 = scmp.eq.s32.totalorder %s21, 7
      %p65 = por %p63, %p64
      %p67 = scmp.ne.s32.totalorder %s50, %s66
      %p68 = scmp.eq.s32.totalorder %s21, 0
      %p69 = por %p67, %p68
      %s70 = ssub.s32 %s15, %s22
      %p71 = scmp.eq.s32.totalorder %s70, 0
      %s73 = sadd.s32 %s72, 1
      %s74 = scalar_select %p71, %s72, %s73
      %p77 = pneg %p71
      %p78 = scmp.eq.s32.totalorder %s15, 7
      %p79 = por %p77, %p78
      %p80 = scmp.ne.s32.totalorder %s72, %s75
      %p81 = scmp.eq.s32.totalorder %s15, 0
      %p82 = por %p80, %p81
      %p83 = scmp.ne.s32.totalorder %s72, %s75
      %p84 = scmp.eq.s32.totalorder %s20, 7
      %p85 = por %p83, %p84
      %p86 = scmp.ne.s32.totalorder %s75, %s76
      %p87 = scmp.eq.s32.totalorder %s20, 0
      %p88 = por %p86, %p87
      %p89 = scmp.ne.s32.totalorder %s75, %s76
      %p90 = scmp.eq.s32.totalorder %s21, 7
      %p91 = por %p89, %p90
      %p93 = scmp.ne.s32.totalorder %s76, %s92
      %p94 = scmp.eq.s32.totalorder %s21, 0
      %p95 = por %p93, %p94
      %p96 = scmp.le.s32.totalorder 1, %s15
      %p97 = scmp.lt.s32.totalorder %s15, 9
      %p98 = pnand %p96, %p97
      %p99 = pneg %p98
      // Predicated region
      $region9: #{tpu_custom_call.1} parent=5 // pred_check
        _
      $region10: #{tpu_custom_call.1} parent=5 // pred_check_branch
        %101 = sbr.rel (%p98) target = $region12
      $region11: #{tpu_custom_call.1} parent=5 // pred_region
        %s102 = ssub.s32 %s15, 1
        // Predicated region
        $region13: #{tpu_custom_call.1} parent=11 // pred_check
          %p103 = pneg %p36
        $region14: #{tpu_custom_call.1} parent=11 // pred_check_branch
          %105 = sbr.rel (%p103) target = $region16
        $region15: #{tpu_custom_call.1} parent=11 // pred_region
          _
        $region16: #{tpu_custom_call.1} parent=11 // pred_fallthru
          _
      $region12: #{tpu_custom_call.1} parent=5 // pred_fallthru
        _
      %p106 = scmp.lt.s32.totalorder %s15, 8
      // Predicated region
      $region17: #{tpu_custom_call.1} parent=5 // pred_check
        %p107 = pneg %p106
      $region18: #{tpu_custom_call.1} parent=5 // pred_check_branch
        %109 = sbr.rel (%p107) target = $region20
      $region19: #{tpu_custom_call.1} parent=5 // pred_region
        // Predicated region
        $region21: #{tpu_custom_call.1} parent=19 // pred_check
          %p110 = pneg %p56
        $region22: #{tpu_custom_call.1} parent=19 // pred_check_branch
          %112 = sbr.rel (%p110) target = $region24
        $region23: #{tpu_custom_call.1} parent=19 // pred_region
          %s113 = sand.u32 %s46, 1
          %s114 = scalar_lea.sflag [#allocation4], %s113
          %s115 = sand.u32 %s46, 1
          %s116 = smul.addr %s115, 512
          %s117 = scalar_lea.vmem [#allocation3], %s116
          %s118 = smul.u32 2, %s15
          %s120 = ssub.s32 8192, 8192
          %121 = vsyncadd %s114, %s120
          %s122 = smul.addr %s118, 32
          %s123 = smul.addr %s122, 128
          %s124 = scalar_lea.hbm %s1, %s123
          %s125 = sshll.u32 %s117, 4
          %s126 = int_to_ptr.vmem [resolvable:$true] %s125
          %131 = dma.hbm_to_vmem [thread:$0]  %s124, 8192, %s126, %s114, 4096, 4096, 256
        $region24: #{tpu_custom_call.1} parent=19 // pred_fallthru
          _
      $region20: #{tpu_custom_call.1} parent=5 // pred_fallthru
        _
      %p132 = scmp.le.s32.totalorder 1, %s15
      %p133 = scmp.lt.s32.totalorder %s15, 9
      %p134 = pnand %p132, %p133
      %p135 = pneg %p134
      // Predicated region
      $region25: #{tpu_custom_call.1} parent=5 // pred_check
        _
      $region26: #{tpu_custom_call.1} parent=5 // pred_check_branch
        %137 = sbr.rel (%p134) target = $region28
      $region27: #{tpu_custom_call.1} parent=5 // pred_region
        %s138 = ssub.s32 %s15, 1
        %s139 = sand.u32 %s49, 1
        %s140 = scalar_lea.sflag [#allocation4], %s139
        %s141 = sand.u32 %s49, 1
        %s142 = smul.addr %s141, 512
        %s143 = scalar_lea.vmem [#allocation3], %s142
        // Predicated region
        $region29: #{tpu_custom_call.1} parent=27 // pred_check
          %p144 = pneg %p62
        $region30: #{tpu_custom_call.1} parent=27 // pred_check_branch
          %146 = sbr.rel (%p144) target = $region32
        $region31: #{tpu_custom_call.1} parent=27 // pred_region
          %147 = dma.done %s140, 8192
        $region32: #{tpu_custom_call.1} parent=27 // pred_fallthru
          _
        %p148 = pneg %p36
        %p149 = pneg %p33
        %s150 = sand.u32 %s49, 1
        %s151 = scalar_lea.sflag [#allocation4], %s150
        %s152 = sand.u32 %s49, 1
        %s153 = smul.addr %s152, 512
        %s154 = scalar_lea.vmem [#allocation3], %s153
        %p155 = pneg %p62
        %p156 = pneg %p59
        %p157 = pneg %p88
        %p158 = pneg %p85
        %s159 = sand.u32 %s75, 1
        %s160 = scalar_lea.sflag [#allocation5], %s159
        %s161 = sand.u32 %s75, 1
        %s162 = smul.addr %s161, 512
        %s163 = scalar_lea.vmem [#allocation6], %s162
        %s164 = smul.u32 2, %s20
        %s165 = smul.u32 2, %s20
        %s166 = sld [smem:[#allocation2]]
        %v167 = vld [vmem:[%s143] sm:$0xff]
        %v168 = vld [vmem:[%s143 + $0x8] sm:$0xff]
        %v169 = vld [vmem:[%s143 + $0x10] sm:$0xff]
        %v170 = vld [vmem:[%s143 + $0x18] sm:$0xff]
        %v171 = vld [vmem:[%s143 + $0x20] sm:$0xff]
        %v172 = vld [vmem:[%s143 + $0x28] sm:$0xff]
        %v173 = vld [vmem:[%s143 + $0x30] sm:$0xff]
        %v174 = vld [vmem:[%s143 + $0x38] sm:$0xff]
        %v175 = vld [vmem:[%s143 + $0x40] sm:$0xff]
        %v176 = vld [vmem:[%s143 + $0x48] sm:$0xff]
        %v177 = vld [vmem:[%s143 + $0x50] sm:$0xff]
        %v178 = vld [vmem:[%s143 + $0x58] sm:$0xff]
        %v179 = vld [vmem:[%s143 + $0x60] sm:$0xff]
        %v180 = vld [vmem:[%s143 + $0x68] sm:$0xff]
        %v181 = vld [vmem:[%s143 + $0x70] sm:$0xff]
        %v182 = vld [vmem:[%s143 + $0x78] sm:$0xff]
        %v183 = vld [vmem:[%s143 + $0x80] sm:$0xff]
        %v184 = vld [vmem:[%s143 + $0x88] sm:$0xff]
        %v185 = vld [vmem:[%s143 + $0x90] sm:$0xff]
        %v186 = vld [vmem:[%s143 + $0x98] sm:$0xff]
        %v187 = vld [vmem:[%s143 + $0xa0] sm:$0xff]
        %v188 = vld [vmem:[%s143 + $0xa8] sm:$0xff]
        %v189 = vld [vmem:[%s143 + $0xb0] sm:$0xff]
        %v190 = vld [vmem:[%s143 + $0xb8] sm:$0xff]
        %v191 = vld [vmem:[%s143 + $0xc0] sm:$0xff]
        %v192 = vld [vmem:[%s143 + $0xc8] sm:$0xff]
        %v193 = vld [vmem:[%s143 + $0xd0] sm:$0xff]
        %v194 = vld [vmem:[%s143 + $0xd8] sm:$0xff]
        %v195 = vld [vmem:[%s143 + $0xe0] sm:$0xff]
        %v196 = vld [vmem:[%s143 + $0xe8] sm:$0xff]
        %v197 = vld [vmem:[%s143 + $0xf0] sm:$0xff]
        %v198 = vld [vmem:[%s143 + $0xf8] sm:$0xff]
        %v199 = vld [vmem:[%s143 + $0x100] sm:$0xff]
        %v200 = vld [vmem:[%s143 + $0x108] sm:$0xff]
        %v201 = vld [vmem:[%s143 + $0x110] sm:$0xff]
        %v202 = vld [vmem:[%s143 + $0x118] sm:$0xff]
        %v203 = vld [vmem:[%s143 + $0x120] sm:$0xff]
        %v204 = vld [vmem:[%s143 + $0x128] sm:$0xff]
        %v205 = vld [vmem:[%s143 + $0x130] sm:$0xff]
        %v206 = vld [vmem:[%s143 + $0x138] sm:$0xff]
        %v207 = vld [vmem:[%s143 + $0x140] sm:$0xff]
        %v208 = vld [vmem:[%s143 + $0x148] sm:$0xff]
        %v209 = vld [vmem:[%s143 + $0x150] sm:$0xff]
        %v210 = vld [vmem:[%s143 + $0x158] sm:$0xff]
        %v211 = vld [vmem:[%s143 + $0x160] sm:$0xff]
        %v212 = vld [vmem:[%s143 + $0x168] sm:$0xff]
        %v213 = vld [vmem:[%s143 + $0x170] sm:$0xff]
        %v214 = vld [vmem:[%s143 + $0x178] sm:$0xff]
        %v215 = vld [vmem:[%s143 + $0x180] sm:$0xff]
        %v216 = vld [vmem:[%s143 + $0x188] sm:$0xff]
        %v217 = vld [vmem:[%s143 + $0x190] sm:$0xff]
        %v218 = vld [vmem:[%s143 + $0x198] sm:$0xff]
        %v219 = vld [vmem:[%s143 + $0x1a0] sm:$0xff]
        %v220 = vld [vmem:[%s143 + $0x1a8] sm:$0xff]
        %v221 = vld [vmem:[%s143 + $0x1b0] sm:$0xff]
        %v222 = vld [vmem:[%s143 + $0x1b8] sm:$0xff]
        %v223 = vld [vmem:[%s143 + $0x1c0] sm:$0xff]
        %v224 = vld [vmem:[%s143 + $0x1c8] sm:$0xff]
        %v225 = vld [vmem:[%s143 + $0x1d0] sm:$0xff]
        %v226 = vld [vmem:[%s143 + $0x1d8] sm:$0xff]
        %v227 = vld [vmem:[%s143 + $0x1e0] sm:$0xff]
        %v228 = vld [vmem:[%s143 + $0x1e8] sm:$0xff]
        %v229 = vld [vmem:[%s143 + $0x1f0] sm:$0xff]
        %v230 = vld [vmem:[%s143 + $0x1f8] sm:$0xff]
        %v231 = vstv %s166
        %v232 = vsub.f32 %v167, %v231
        %v233 = vsub.f32 %v168, %v231
        %v234 = vsub.f32 %v169, %v231
        %v235 = vsub.f32 %v170, %v231
        %v236 = vsub.f32 %v171, %v231
        %v237 = vsub.f32 %v172, %v231
        %v238 = vsub.f32 %v173, %v231
        %v239 = vsub.f32 %v174, %v231
        %v240 = vsub.f32 %v175, %v231
        %v241 = vsub.f32 %v176, %v231
        %v242 = vsub.f32 %v177, %v231
        %v243 = vsub.f32 %v178, %v231
        %v244 = vsub.f32 %v179, %v231
        %v245 = vsub.f32 %v180, %v231
        %v246 = vsub.f32 %v181, %v231
        %v247 = vsub.f32 %v182, %v231
        %v248 = vsub.f32 %v183, %v231
        %v249 = vsub.f32 %v184, %v231
        %v250 = vsub.f32 %v185, %v231
        %v251 = vsub.f32 %v186, %v231
        %v252 = vsub.f32 %v187, %v231
        %v253 = vsub.f32 %v188, %v231
        %v254 = vsub.f32 %v189, %v231
        %v255 = vsub.f32 %v190, %v231
        %v256 = vsub.f32 %v191, %v231
        %v257 = vsub.f32 %v192, %v231
        %v258 = vsub.f32 %v193, %v231
        %v259 = vsub.f32 %v194, %v231
        %v260 = vsub.f32 %v195, %v231
        %v261 = vsub.f32 %v196, %v231
        %v262 = vsub.f32 %v197, %v231
        %v263 = vsub.f32 %v198, %v231
        %v264 = vsub.f32 %v199, %v231
        %v265 = vsub.f32 %v200, %v231
        %v266 = vsub.f32 %v201, %v231
        %v267 = vsub.f32 %v202, %v231
        %v268 = vsub.f32 %v203, %v231
        %v269 = vsub.f32 %v204, %v231
        %v270 = vsub.f32 %v205, %v231
        %v271 = vsub.f32 %v206, %v231
        %v272 = vsub.f32 %v207, %v231
        %v273 = vsub.f32 %v208, %v231
        %v274 = vsub.f32 %v209, %v231
        %v275 = vsub.f32 %v210, %v231
        %v276 = vsub.f32 %v211, %v231
        %v277 = vsub.f32 %v212, %v231
        %v278 = vsub.f32 %v213, %v231
        %v279 = vsub.f32 %v214, %v231
        %v280 = vsub.f32 %v215, %v231
        %v281 = vsub.f32 %v216, %v231
        %v282 = vsub.f32 %v217, %v231
        %v283 = vsub.f32 %v218, %v231
        %v284 = vsub.f32 %v219, %v231
        %v285 = vsub.f32 %v220, %v231
        %v286 = vsub.f32 %v221, %v231
        %v287 = vsub.f32 %v222, %v231
        %v288 = vsub.f32 %v223, %v231
        %v289 = vsub.f32 %v224, %v231
        %v290 = vsub.f32 %v225, %v231
        %v291 = vsub.f32 %v226, %v231
        %v292 = vsub.f32 %v227, %v231
        %v293 = vsub.f32 %v228, %v231
        %v294 = vsub.f32 %v229, %v231
        %v295 = vsub.f32 %v230, %v231
        %v296 = vmax.f32 %v232, 0.0
        %v297 = vmax.f32 %v233, 0.0
        %v298 = vmax.f32 %v234, 0.0
        %v299 = vmax.f32 %v235, 0.0
        %v300 = vmax.f32 %v236, 0.0
        %v301 = vmax.f32 %v237, 0.0
        %v302 = vmax.f32 %v238, 0.0
        %v303 = vmax.f32 %v239, 0.0
        %v304 = vmax.f32 %v240, 0.0
        %v305 = vmax.f32 %v241, 0.0
        %v306 = vmax.f32 %v242, 0.0
        %v307 = vmax.f32 %v243, 0.0
        %v308 = vmax.f32 %v244, 0.0
        %v309 = vmax.f32 %v245, 0.0
        %v310 = vmax.f32 %v246, 0.0
        %v311 = vmax.f32 %v247, 0.0
        %v312 = vmax.f32 %v248, 0.0
        %v313 = vmax.f32 %v249, 0.0
        %v314 = vmax.f32 %v250, 0.0
        %v315 = vmax.f32 %v251, 0.0
        %v316 = vmax.f32 %v252, 0.0
        %v317 = vmax.f32 %v253, 0.0
        %v318 = vmax.f32 %v254, 0.0
        %v319 = vmax.f32 %v255, 0.0
        %v320 = vmax.f32 %v256, 0.0
        %v321 = vmax.f32 %v257, 0.0
        %v322 = vmax.f32 %v258, 0.0
        %v323 = vmax.f32 %v259, 0.0
        %v324 = vmax.f32 %v260, 0.0
        %v325 = vmax.f32 %v261, 0.0
        %v326 = vmax.f32 %v262, 0.0
        %v327 = vmax.f32 %v263, 0.0
        %v328 = vmax.f32 %v264, 0.0
        %v329 = vmax.f32 %v265, 0.0
        %v330 = vmax.f32 %v266, 0.0
        %v331 = vmax.f32 %v267, 0.0
        %v332 = vmax.f32 %v268, 0.0
        %v333 = vmax.f32 %v269, 0.0
        %v334 = vmax.f32 %v270, 0.0
        %v335 = vmax.f32 %v271, 0.0
        %v336 = vmax.f32 %v272, 0.0
        %v337 = vmax.f32 %v273, 0.0
        %v338 = vmax.f32 %v274, 0.0
        %v339 = vmax.f32 %v275, 0.0
        %v340 = vmax.f32 %v276, 0.0
        %v341 = vmax.f32 %v277, 0.0
        %v342 = vmax.f32 %v278, 0.0
        %v343 = vmax.f32 %v279, 0.0
        %v344 = vmax.f32 %v280, 0.0
        %v345 = vmax.f32 %v281, 0.0
        %v346 = vmax.f32 %v282, 0.0
        %v347 = vmax.f32 %v283, 0.0
        %v348 = vmax.f32 %v284, 0.0
        %v349 = vmax.f32 %v285, 0.0
        %v350 = vmax.f32 %v286, 0.0
        %v351 = vmax.f32 %v287, 0.0
        %v352 = vmax.f32 %v288, 0.0
        %v353 = vmax.f32 %v289, 0.0
        %v354 = vmax.f32 %v290, 0.0
        %v355 = vmax.f32 %v291, 0.0
        %v356 = vmax.f32 %v292, 0.0
        %v357 = vmax.f32 %v293, 0.0
        %v358 = vmax.f32 %v294, 0.0
        %v359 = vmax.f32 %v295, 0.0
        %360 = vst [vmem:[%s163] sm:$0xff] %v296
        %361 = vst [vmem:[%s163 + $0x8] sm:$0xff] %v297
        %362 = vst [vmem:[%s163 + $0x10] sm:$0xff] %v298
        %363 = vst [vmem:[%s163 + $0x18] sm:$0xff] %v299
        %364 = vst [vmem:[%s163 + $0x20] sm:$0xff] %v300
        %365 = vst [vmem:[%s163 + $0x28] sm:$0xff] %v301
        %366 = vst [vmem:[%s163 + $0x30] sm:$0xff] %v302
        %367 = vst [vmem:[%s163 + $0x38] sm:$0xff] %v303
        %368 = vst [vmem:[%s163 + $0x40] sm:$0xff] %v304
        %369 = vst [vmem:[%s163 + $0x48] sm:$0xff] %v305
        %370 = vst [vmem:[%s163 + $0x50] sm:$0xff] %v306
        %371 = vst [vmem:[%s163 + $0x58] sm:$0xff] %v307
        %372 = vst [vmem:[%s163 + $0x60] sm:$0xff] %v308
        %373 = vst [vmem:[%s163 + $0x68] sm:$0xff] %v309
        %374 = vst [vmem:[%s163 + $0x70] sm:$0xff] %v310
        %375 = vst [vmem:[%s163 + $0x78] sm:$0xff] %v311
        %376 = vst [vmem:[%s163 + $0x80] sm:$0xff] %v312
        %377 = vst [vmem:[%s163 + $0x88] sm:$0xff] %v313
        %378 = vst [vmem:[%s163 + $0x90] sm:$0xff] %v314
        %379 = vst [vmem:[%s163 + $0x98] sm:$0xff] %v315
        %380 = vst [vmem:[%s163 + $0xa0] sm:$0xff] %v316
        %381 = vst [vmem:[%s163 + $0xa8] sm:$0xff] %v317
        %382 = vst [vmem:[%s163 + $0xb0] sm:$0xff] %v318
        %383 = vst [vmem:[%s163 + $0xb8] sm:$0xff] %v319
        %384 = vst [vmem:[%s163 + $0xc0] sm:$0xff] %v320
        %385 = vst [vmem:[%s163 + $0xc8] sm:$0xff] %v321
        %386 = vst [vmem:[%s163 + $0xd0] sm:$0xff] %v322
        %387 = vst [vmem:[%s163 + $0xd8] sm:$0xff] %v323
        %388 = vst [vmem:[%s163 + $0xe0] sm:$0xff] %v324
        %389 = vst [vmem:[%s163 + $0xe8] sm:$0xff] %v325
        %390 = vst [vmem:[%s163 + $0xf0] sm:$0xff] %v326
        %391 = vst [vmem:[%s163 + $0xf8] sm:$0xff] %v327
        %392 = vst [vmem:[%s163 + $0x100] sm:$0xff] %v328
        %393 = vst [vmem:[%s163 + $0x108] sm:$0xff] %v329
        %394 = vst [vmem:[%s163 + $0x110] sm:$0xff] %v330
        %395 = vst [vmem:[%s163 + $0x118] sm:$0xff] %v331
        %396 = vst [vmem:[%s163 + $0x120] sm:$0xff] %v332
        %397 = vst [vmem:[%s163 + $0x128] sm:$0xff] %v333
        %398 = vst [vmem:[%s163 + $0x130] sm:$0xff] %v334
        %399 = vst [vmem:[%s163 + $0x138] sm:$0xff] %v335
        %400 = vst [vmem:[%s163 + $0x140] sm:$0xff] %v336
        %401 = vst [vmem:[%s163 + $0x148] sm:$0xff] %v337
        %402 = vst [vmem:[%s163 + $0x150] sm:$0xff] %v338
        %403 = vst [vmem:[%s163 + $0x158] sm:$0xff] %v339
        %404 = vst [vmem:[%s163 + $0x160] sm:$0xff] %v340
        %405 = vst [vmem:[%s163 + $0x168] sm:$0xff] %v341
        %406 = vst [vmem:[%s163 + $0x170] sm:$0xff] %v342
        %407 = vst [vmem:[%s163 + $0x178] sm:$0xff] %v343
        %408 = vst [vmem:[%s163 + $0x180] sm:$0xff] %v344
        %409 = vst [vmem:[%s163 + $0x188] sm:$0xff] %v345
        %410 = vst [vmem:[%s163 + $0x190] sm:$0xff] %v346
        %411 = vst [vmem:[%s163 + $0x198] sm:$0xff] %v347
        %412 = vst [vmem:[%s163 + $0x1a0] sm:$0xff] %v348
        %413 = vst [vmem:[%s163 + $0x1a8] sm:$0xff] %v349
        %414 = vst [vmem:[%s163 + $0x1b0] sm:$0xff] %v350
        %415 = vst [vmem:[%s163 + $0x1b8] sm:$0xff] %v351
        %416 = vst [vmem:[%s163 + $0x1c0] sm:$0xff] %v352
        %417 = vst [vmem:[%s163 + $0x1c8] sm:$0xff] %v353
        %418 = vst [vmem:[%s163 + $0x1d0] sm:$0xff] %v354
        %419 = vst [vmem:[%s163 + $0x1d8] sm:$0xff] %v355
        %420 = vst [vmem:[%s163 + $0x1e0] sm:$0xff] %v356
        %421 = vst [vmem:[%s163 + $0x1e8] sm:$0xff] %v357
        %422 = vst [vmem:[%s163 + $0x1f0] sm:$0xff] %v358
        %423 = vst [vmem:[%s163 + $0x1f8] sm:$0xff] %v359
        %s424 = sand.u32 %s75, 1
        %s425 = scalar_lea.sflag [#allocation5], %s424
        %s426 = sand.u32 %s75, 1
        %s427 = smul.addr %s426, 512
        %s428 = scalar_lea.vmem [#allocation6], %s427
        // Predicated region
        $region33: #{tpu_custom_call.1} parent=27 // pred_check
          %p429 = pneg %p85
        $region34: #{tpu_custom_call.1} parent=27 // pred_check_branch
          %431 = sbr.rel (%p429) target = $region36
        $region35: #{tpu_custom_call.1} parent=27 // pred_region
          %s432 = smul.u32 2, %s20
          %s434 = ssub.s32 8192, 8192
          %435 = vsyncadd %s425, %s434
          %s436 = smul.addr %s432, 32
          %s437 = smul.addr %s436, 128
          %s438 = scalar_lea.hbm %s2, %s437
          %s439 = sshll.u32 %s428, 4
          %s440 = int_to_ptr.vmem [resolvable:$true] %s439
          %445 = dma.vmem_to_hbm [thread:$0]  %s440, 8192, %s438, %s425, 4096, 4096, 256
        $region36: #{tpu_custom_call.1} parent=27 // pred_fallthru
          _
      $region28: #{tpu_custom_call.1} parent=5 // pred_fallthru
        _
      %p446 = scmp.le.s32.totalorder 2, %s15
      // Predicated region
      $region37: #{tpu_custom_call.1} parent=5 // pred_check
        %p447 = pneg %p446
      $region38: #{tpu_custom_call.1} parent=5 // pred_check_branch
        %449 = sbr.rel (%p447) target = $region40
      $region39: #{tpu_custom_call.1} parent=5 // pred_region
        %s450 = ssub.s32 %s15, 2
        // Predicated region
        $region41: #{tpu_custom_call.1} parent=39 // pred_check
          %p451 = pneg %p91
        $region42: #{tpu_custom_call.1} parent=39 // pred_check_branch
          %453 = sbr.rel (%p451) target = $region44
        $region43: #{tpu_custom_call.1} parent=39 // pred_region
          %s454 = sand.u32 %s76, 1
          %s455 = scalar_lea.sflag [#allocation5], %s454
          %s456 = sand.u32 %s76, 1
          %s457 = smul.addr %s456, 512
          %s458 = scalar_lea.vmem [#allocation6], %s457
          %459 = dma.done %s455, 8192
        $region44: #{tpu_custom_call.1} parent=39 // pred_fallthru
          _
      $region40: #{tpu_custom_call.1} parent=5 // pred_fallthru
        _
    $region6: #{tpu_custom_call.1} parent=1 // loop_footer
      %s19 = sadd.s32 1, %s15
    $region7: #{tpu_custom_call.1} parent=1 // loop_footer_branch
      %14 = sbr.rel target = $region3
    $region8: #{tpu_custom_call.1} parent=1 // loop_exit
      _
    %460 = vsyncpa [#allocation4], 1
    %s461 = scalar_lea.sflag [#allocation4], 1
    %462 = vsyncpa %s461, 1
    %463 = vsyncpa [#allocation5], 1
    %s464 = scalar_lea.sflag [#allocation5], 1
    %465 = vsyncpa %s464, 1

</llo_original>
